<compile_context>
chip_gen: v5e
topology: v5e:2x2
jax: 0.10.0
libtpu: 0.0.40
codegen_flags: <defaults>
</compile_context>

<pallas_src>
import functools

import jax
import jax.numpy as jnp
from jax.experimental import pallas as pl
from jax.experimental.pallas import tpu as pltpu


def _masked_adaptive_bn_train_kernel(
    x_ref, inv_mask_ref, gamma_ref, beta_ref, rmean_ref, rstd_ref,
    y_ref, new_rmean_ref, new_rstd_ref,
    *, eps, momentum, r_max, d_max):
  embed_dim = x_ref.shape[2]

  # ---- masked per-seq-position statistics (reduce over batch, then lanes) ----
  inv_mask = inv_mask_ref[...]                       # [B, St, 1] f32 (pre-cast in glue)
  xf = x_ref[...].astype(jnp.float32)                # [B, St, E]
  xm = xf * inv_mask                                 # single mask multiply, reused

  sum_b = jnp.sum(xm, axis=0)                        # [St, E]  (cheap VPU adds over B)
  sumsq_b = jnp.sum(xm * xf, axis=0)                 # [St, E]
  s1 = jnp.sum(sum_b, axis=-1, keepdims=True)        # [St, 1]  (one XLU lane-reduce)
  s2 = jnp.sum(sumsq_b, axis=-1, keepdims=True)      # [St, 1]

  # NOTE: if a seq position is padded across the whole batch, nonpads == 0 and
  # the result is NaN/Inf — identical to the PyTorch reference behavior.
  nonpads = jnp.sum(inv_mask, axis=0) * float(embed_dim)   # [St, 1]
  inv_n = 1.0 / nonpads
  batch_mean = s1 * inv_n                                  # [St, 1]
  batch_var = s2 * inv_n - batch_mean * batch_mean
  batch_std = jnp.sqrt(jnp.clip(batch_var, eps, 1e10))

  rmean = rmean_ref[0]                                     # [St, 1]
  rstd = rstd_ref[0]                                       # [St, 1]
  inv_r_max = (1.0 / r_max) if r_max != 0.0 else float("inf")
  r = jnp.clip(batch_std / rstd, inv_r_max, r_max)
  d = jnp.clip((batch_mean - rmean) / rstd, -d_max, d_max)

  gamma = gamma_ref[0]                                     # [St, 1]
  beta = beta_ref[0]                                       # [St, 1]

  # ---- fold renorm + affine into one per-element mul-add ----
  rg_over_std = r * gamma / batch_std                      # [St, 1]
  scale = rg_over_std[None]                                # [1, St, 1]
  shift = (gamma * d - batch_mean * rg_over_std + beta)[None]
  y_ref[...] = (x_ref[...].astype(jnp.float32) * scale + shift).astype(y_ref.dtype)

  # ---- running-buffer updates (functional outputs) ----
  new_rmean_ref[...] = (
      ((1.0 - momentum) * rmean + momentum * batch_mean)[None]
  ).astype(new_rmean_ref.dtype)
  new_rstd_ref[...] = (
      ((1.0 - momentum) * rstd + momentum * batch_std)[None]
  ).astype(new_rstd_ref.dtype)


def _choose_tile_s(bsz, seq_len, embed_dim, x_itemsize, budget_bytes=12 << 20):
  """Largest seq tile that (a) divides seq_len, (b) satisfies the (8,128) rule
  (multiple of 8 or full extent), (c) keeps double-buffered x/y + f32 temps
  within `budget_bytes` (well under the default 32 MiB scoped VMEM)."""
  # per-position bytes: x in (x2 double-buffered) + y out (x2) + ~1 f32 temp.
  per_s = bsz * embed_dim * (2 * x_itemsize + 2 * x_itemsize + 8)
  max_tile = max(1, budget_bytes // max(per_s, 1))
  if seq_len <= max_tile:
    return seq_len
  for t in range(min(seq_len, max_tile), 0, -1):
    if seq_len % t == 0 and t % 8 == 0:
      return t
  # Fallback: no 8-aligned divisor fits — use the full extent (always legal).
  return seq_len


def masked_adaptive_bn_forward(x, mask, gamma, beta, running_mean, running_std,
                               r_max, d_max, *, momentum=0.1, eps=1e-5):
  """Training-mode forward.  Returns (x_normalized, new_running_mean, new_running_std)."""
  bsz, seq_len, embed_dim = x.shape

  # ---- plain-JAX glue: slice params/buffers to seq_len, build f32 inv_mask ----
  gamma_s = gamma[:, :seq_len, :].astype(jnp.float32)
  beta_s = beta[:, :seq_len, :].astype(jnp.float32)
  rmean_s = running_mean[:, :seq_len, :].astype(jnp.float32)
  rstd_s = running_std[:, :seq_len, :].astype(jnp.float32)
  if mask is not None:
    inv_mask = (1.0 - mask.astype(jnp.float32))[:, :, None]       # [B, S, 1]
  else:
    inv_mask = jnp.ones((bsz, seq_len, 1), dtype=jnp.float32)

  tile_s = _choose_tile_s(bsz, seq_len, embed_dim, x.dtype.itemsize)
  num_tiles = seq_len // tile_s

  kernel = functools.partial(
      _masked_adaptive_bn_train_kernel,
      eps=float(eps), momentum=float(momentum),
      r_max=float(r_max), d_max=float(d_max))

  x_spec = pl.BlockSpec((bsz, tile_s, embed_dim), lambda s: (0, s, 0))
  mask_spec = pl.BlockSpec((bsz, tile_s, 1), lambda s: (0, s, 0))
  per_seq_spec = pl.BlockSpec((1, tile_s, 1), lambda s: (0, s, 0))

  y, new_rmean, new_rstd = pl.pallas_call(
      kernel,
      grid=(num_tiles,),
      in_specs=[
          x_spec,          # x
          mask_spec,       # inv_mask (f32)
          per_seq_spec,    # gamma
          per_seq_spec,    # beta
          per_seq_spec,    # running_mean slice
          per_seq_spec,    # running_std slice
      ],
      out_specs=[
          x_spec,          # y
          per_seq_spec,    # new running_mean slice
          per_seq_spec,    # new running_std slice
      ],
      out_shape=[
          jax.ShapeDtypeStruct((bsz, seq_len, embed_dim), x.dtype),
          jax.ShapeDtypeStruct((1, seq_len, 1), jnp.float32),
          jax.ShapeDtypeStruct((1, seq_len, 1), jnp.float32),
      ],
      compiler_params=pltpu.CompilerParams(
          dimension_semantics=("parallel",)),
  )(x, inv_mask, gamma_s, beta_s, rmean_s, rstd_s)

  # Functional equivalent of the PyTorch in-place buffer write (glue).
  new_running_mean = running_mean.at[:, :seq_len, :].set(
      new_rmean.astype(running_mean.dtype))
  new_running_std = running_std.at[:, :seq_len, :].set(
      new_rstd.astype(running_std.dtype))
  # TODO(synk): r/d use .detach() in PyTorch; a custom_vjp is needed if this
  # forward is ever differentiated.
  return y, new_running_mean, new_running_std


def _reference_forward(x, mask, gamma, beta, running_mean, running_std,
                       r_max, d_max, momentum, eps):
  """Pure-JAX port of the PyTorch training-mode forward (for verification)."""
  bsz, seq_len, embed_dim = x.shape
  rmean = running_mean[:, :seq_len, :]
  rstd = running_std[:, :seq_len, :]
  inv_mask = (1.0 - mask.astype(x.dtype))[:, :, None]
  nonpads = jnp.sum(inv_mask, axis=0, keepdims=True) * embed_dim
  batch_mean = jnp.sum(x * inv_mask, axis=(0, 2), keepdims=True) / nonpads
  batch_var = (jnp.sum(x ** 2 * inv_mask, axis=(0, 2), keepdims=True) / nonpads
               - batch_mean ** 2)
  batch_std = jnp.sqrt(jnp.clip(batch_var, eps, 1e10))
  r = jnp.clip(batch_std / rstd, 1.0 / r_max, r_max)
  d = jnp.clip((batch_mean - rmean) / rstd, -d_max, d_max)
  xn = (x - batch_mean) * r / batch_std + d
  xn = xn * gamma[:, :seq_len, :] + beta[:, :seq_len, :]
  new_rm = running_mean.at[:, :seq_len, :].set(
      (1.0 - momentum) * rmean + momentum * batch_mean)
  new_rs = running_std.at[:, :seq_len, :].set(
      (1.0 - momentum) * rstd + momentum * batch_std)
  return xn, new_rm, new_rs


if __name__ == "__main__":
  bsz, seq_len, embed_dim = 2, 8, 32
  max_nc = 16
  momentum, eps = 0.1, 1e-5

  key = jax.random.PRNGKey(0)
  x = jax.random.normal(key, (bsz, seq_len, embed_dim), dtype=jnp.float32)

  # mask: 1 at padded positions (lengths 8 and 5).
  lengths = jnp.array([8, 5], dtype=jnp.int32)
  positions = jnp.arange(seq_len, dtype=jnp.int32)[None, :]
  mask = (positions >= lengths[:, None]).astype(jnp.float32)        # [B, S]

  # Deterministic parameter init, as in reset_parameters().
  gamma = jnp.ones((1, max_nc, 1), dtype=jnp.float32)
  beta = jnp.zeros((1, max_nc, 1), dtype=jnp.float32)
  running_mean = jnp.zeros((1, max_nc, 1), dtype=jnp.float32)
  running_std = jnp.ones((1, max_nc, 1), dtype=jnp.float32)
  r_max, d_max = 1.0, 0.0

  y, new_rm, new_rs = masked_adaptive_bn_forward(
      x, mask, gamma, beta, running_mean, running_std, r_max, d_max,
      momentum=momentum, eps=eps)
  jax.block_until_ready((y, new_rm, new_rs))

  y_ref, rm_ref, rs_ref = _reference_forward(
      x, mask, gamma, beta, running_mean, running_std, r_max, d_max,
      momentum, eps)

  assert jnp.allclose(y, y_ref, atol=1e-5, rtol=1e-5), "output mismatch"
  assert jnp.allclose(new_rm, rm_ref, atol=1e-6, rtol=1e-6), "running_mean mismatch"
  assert jnp.allclose(new_rs, rs_ref, atol=1e-6, rtol=1e-6), "running_std mismatch"

  print("KERNEL_OK")
</pallas_src>

<mosaic_0001>
module attributes {stable_mosaic.version = 11 : i64} {
  func.func @_masked_adaptive_bn_train_kernel(%arg0: i32, %arg1: memref<2x8x32xf32, #tpu.memory_space<vmem>>, %arg2: memref<2x8x1xf32, #tpu.memory_space<vmem>>, %arg3: memref<1x8x1xf32, #tpu.memory_space<vmem>>, %arg4: memref<1x8x1xf32, #tpu.memory_space<vmem>>, %arg5: memref<1x8x1xf32, #tpu.memory_space<vmem>>, %arg6: memref<1x8x1xf32, #tpu.memory_space<vmem>>, %arg7: memref<2x8x32xf32, #tpu.memory_space<vmem>>, %arg8: memref<1x8x1xf32, #tpu.memory_space<vmem>>, %arg9: memref<1x8x1xf32, #tpu.memory_space<vmem>>) attributes {dimension_semantics = [#tpu.dimension_semantics<parallel>], iteration_bounds = array<i64: 1>, scalar_prefetch = 0 : i64, scratch_operands = 0 : i64, tpu.core_type = #tpu.core_type<tc>, window_params = [{transform_indices = @transform_0, window_bounds = array<i64: 2, 8, 32>}, {transform_indices = @transform_1, window_bounds = array<i64: 2, 8, 1>}, {transform_indices = @transform_2, window_bounds = array<i64: 1, 8, 1>}, {transform_indices = @transform_3, window_bounds = array<i64: 1, 8, 1>}, {transform_indices = @transform_4, window_bounds = array<i64: 1, 8, 1>}, {transform_indices = @transform_5, window_bounds = array<i64: 1, 8, 1>}, {transform_indices = @transform_6, window_bounds = array<i64: 2, 8, 32>}, {transform_indices = @transform_7, window_bounds = array<i64: 1, 8, 1>}, {transform_indices = @transform_8, window_bounds = array<i64: 1, 8, 1>}]} {
    %c0 = arith.constant 0 : index
    %c0_0 = arith.constant 0 : index
    %c0_1 = arith.constant 0 : index
    %0 = vector.load %arg2[%c0, %c0_0, %c0_1] : memref<2x8x1xf32, #tpu.memory_space<vmem>>, vector<2x8x1xf32>
    %c0_2 = arith.constant 0 : index
    %c0_3 = arith.constant 0 : index
    %c0_4 = arith.constant 0 : index
    %1 = vector.load %arg1[%c0_2, %c0_3, %c0_4] : memref<2x8x32xf32, #tpu.memory_space<vmem>>, vector<2x8x32xf32>
    %2 = vector.broadcast %0 : vector<2x8x1xf32> to vector<2x8x32xf32>
    %3 = arith.mulf %1, %2 : vector<2x8x32xf32>
    %cst = arith.constant dense<0.000000e+00> : vector<8x32xf32>
    %4 = vector.multi_reduction <add>, %3, %cst [0] : vector<2x8x32xf32> to vector<8x32xf32>
    %5 = arith.mulf %3, %1 : vector<2x8x32xf32>
    %cst_5 = arith.constant dense<0.000000e+00> : vector<8x32xf32>
    %6 = vector.multi_reduction <add>, %5, %cst_5 [0] : vector<2x8x32xf32> to vector<8x32xf32>
    %cst_6 = arith.constant dense<0.000000e+00> : vector<8xf32>
    %7 = vector.multi_reduction <add>, %4, %cst_6 [1] : vector<8x32xf32> to vector<8xf32>
    %8 = vector.shape_cast %7 : vector<8xf32> to vector<8x1xf32>
    %cst_7 = arith.constant dense<0.000000e+00> : vector<8xf32>
    %9 = vector.multi_reduction <add>, %6, %cst_7 [1] : vector<8x32xf32> to vector<8xf32>
    %10 = vector.shape_cast %9 : vector<8xf32> to vector<8x1xf32>
    %cst_8 = arith.constant dense<0.000000e+00> : vector<8x1xf32>
    %11 = vector.multi_reduction <add>, %0, %cst_8 [0] : vector<2x8x1xf32> to vector<8x1xf32>
    %cst_9 = arith.constant 3.200000e+01 : f32
    %12 = vector.broadcast %cst_9 : f32 to vector<8x1xf32>
    %13 = arith.mulf %11, %12 : vector<8x1xf32>
    %cst_10 = arith.constant 1.000000e+00 : f32
    %14 = vector.broadcast %cst_10 : f32 to vector<8x1xf32>
    %15 = arith.divf %14, %13 : vector<8x1xf32>
    %16 = arith.mulf %8, %15 : vector<8x1xf32>
    %17 = arith.mulf %10, %15 : vector<8x1xf32>
    %18 = arith.mulf %16, %16 : vector<8x1xf32>
    %19 = arith.subf %17, %18 : vector<8x1xf32>
    %cst_11 = arith.constant 9.99999974E-6 : f32
    %cst_12 = arith.constant 1.000000e+10 : f32
    %20 = vector.broadcast %cst_11 : f32 to vector<8x1xf32>
    %21 = arith.maximumf %20, %19 : vector<8x1xf32>
    %22 = vector.broadcast %cst_12 : f32 to vector<8x1xf32>
    %23 = arith.minimumf %22, %21 : vector<8x1xf32>
    %24 = math.sqrt %23 : vector<8x1xf32>
    %c0_13 = arith.constant 0 : index
    %c0_14 = arith.constant 0 : index
    %c0_15 = arith.constant 0 : index
    %25 = vector.load %arg5[%c0_13, %c0_14, %c0_15] : memref<1x8x1xf32, #tpu.memory_space<vmem>>, vector<1x8x1xf32>
    %26 = vector.shape_cast %25 : vector<1x8x1xf32> to vector<8x1xf32>
    %c0_16 = arith.constant 0 : index
    %c0_17 = arith.constant 0 : index
    %c0_18 = arith.constant 0 : index
    %27 = vector.load %arg6[%c0_16, %c0_17, %c0_18] : memref<1x8x1xf32, #tpu.memory_space<vmem>>, vector<1x8x1xf32>
    %28 = vector.shape_cast %27 : vector<1x8x1xf32> to vector<8x1xf32>
    %29 = arith.divf %24, %28 : vector<8x1xf32>
    %cst_19 = arith.constant 1.000000e+00 : f32
    %cst_20 = arith.constant 1.000000e+00 : f32
    %30 = vector.broadcast %cst_19 : f32 to vector<8x1xf32>
    %31 = arith.maximumf %30, %29 : vector<8x1xf32>
    %32 = vector.broadcast %cst_20 : f32 to vector<8x1xf32>
    %33 = arith.minimumf %32, %31 : vector<8x1xf32>
    %34 = arith.subf %16, %26 : vector<8x1xf32>
    %35 = arith.divf %34, %28 : vector<8x1xf32>
    %cst_21 = arith.constant -0.000000e+00 : f32
    %cst_22 = arith.constant 0.000000e+00 : f32
    %36 = vector.broadcast %cst_21 : f32 to vector<8x1xf32>
    %37 = arith.maximumf %36, %35 : vector<8x1xf32>
    %38 = vector.broadcast %cst_22 : f32 to vector<8x1xf32>
    %39 = arith.minimumf %38, %37 : vector<8x1xf32>
    %c0_23 = arith.constant 0 : index
    %c0_24 = arith.constant 0 : index
    %c0_25 = arith.constant 0 : index
    %40 = vector.load %arg3[%c0_23, %c0_24, %c0_25] : memref<1x8x1xf32, #tpu.memory_space<vmem>>, vector<1x8x1xf32>
    %41 = vector.shape_cast %40 : vector<1x8x1xf32> to vector<8x1xf32>
    %c0_26 = arith.constant 0 : index
    %c0_27 = arith.constant 0 : index
    %c0_28 = arith.constant 0 : index
    %42 = vector.load %arg4[%c0_26, %c0_27, %c0_28] : memref<1x8x1xf32, #tpu.memory_space<vmem>>, vector<1x8x1xf32>
    %43 = vector.shape_cast %42 : vector<1x8x1xf32> to vector<8x1xf32>
    %44 = arith.mulf %33, %41 : vector<8x1xf32>
    %45 = arith.divf %44, %24 : vector<8x1xf32>
    %46 = vector.shape_cast %45 : vector<8x1xf32> to vector<1x8x1xf32>
    %47 = arith.mulf %41, %39 : vector<8x1xf32>
    %48 = arith.mulf %16, %45 : vector<8x1xf32>
    %49 = arith.subf %47, %48 : vector<8x1xf32>
    %50 = arith.addf %49, %43 : vector<8x1xf32>
    %51 = vector.shape_cast %50 : vector<8x1xf32> to vector<1x8x1xf32>
    %c0_29 = arith.constant 0 : index
    %c0_30 = arith.constant 0 : index
    %c0_31 = arith.constant 0 : index
    %52 = vector.load %arg1[%c0_29, %c0_30, %c0_31] : memref<2x8x32xf32, #tpu.memory_space<vmem>>, vector<2x8x32xf32>
    %53 = vector.broadcast %46 : vector<1x8x1xf32> to vector<2x8x32xf32>
    %54 = arith.mulf %52, %53 : vector<2x8x32xf32>
    %55 = vector.broadcast %51 : vector<1x8x1xf32> to vector<2x8x32xf32>
    %56 = arith.addf %54, %55 : vector<2x8x32xf32>
    %c0_32 = arith.constant 0 : index
    %c0_33 = arith.constant 0 : index
    %c0_34 = arith.constant 0 : index
    %57 = vector.load %arg7[%c0_32, %c0_33, %c0_34] : memref<2x8x32xf32, #tpu.memory_space<vmem>>, vector<2x8x32xf32>
    tpu.vector_store %arg7[%c0_32, %c0_33, %c0_34], %56 {strides = array<i32>} : memref<2x8x32xf32, #tpu.memory_space<vmem>>, vector<2x8x32xf32>,
    %cst_35 = arith.constant 0.899999976 : f32
    %58 = vector.broadcast %cst_35 : f32 to vector<8x1xf32>
    %59 = arith.mulf %58, %26 : vector<8x1xf32>
    %cst_36 = arith.constant 1.000000e-01 : f32
    %60 = vector.broadcast %cst_36 : f32 to vector<8x1xf32>
    %61 = arith.mulf %60, %16 : vector<8x1xf32>
    %62 = arith.addf %59, %61 : vector<8x1xf32>
    %63 = vector.shape_cast %62 : vector<8x1xf32> to vector<1x8x1xf32>
    %c0_37 = arith.constant 0 : index
    %c0_38 = arith.constant 0 : index
    %c0_39 = arith.constant 0 : index
    %64 = vector.load %arg8[%c0_37, %c0_38, %c0_39] : memref<1x8x1xf32, #tpu.memory_space<vmem>>, vector<1x8x1xf32>
    tpu.vector_store %arg8[%c0_37, %c0_38, %c0_39], %63 {strides = array<i32>} : memref<1x8x1xf32, #tpu.memory_space<vmem>>, vector<1x8x1xf32>,
    %cst_40 = arith.constant 0.899999976 : f32
    %65 = vector.broadcast %cst_40 : f32 to vector<8x1xf32>
    %66 = arith.mulf %65, %28 : vector<8x1xf32>
    %cst_41 = arith.constant 1.000000e-01 : f32
    %67 = vector.broadcast %cst_41 : f32 to vector<8x1xf32>
    %68 = arith.mulf %67, %24 : vector<8x1xf32>
    %69 = arith.addf %66, %68 : vector<8x1xf32>
    %70 = vector.shape_cast %69 : vector<8x1xf32> to vector<1x8x1xf32>
    %c0_42 = arith.constant 0 : index
    %c0_43 = arith.constant 0 : index
    %c0_44 = arith.constant 0 : index
    %71 = vector.load %arg9[%c0_42, %c0_43, %c0_44] : memref<1x8x1xf32, #tpu.memory_space<vmem>>, vector<1x8x1xf32>
    tpu.vector_store %arg9[%c0_42, %c0_43, %c0_44], %70 {strides = array<i32>} : memref<1x8x1xf32, #tpu.memory_space<vmem>>, vector<1x8x1xf32>,
    return
  }
  func.func @transform_0(%arg0: i32) -> (i32, i32, i32) {
    %c0_i32 = arith.constant 0 : i32
    %c0_i32_0 = arith.constant 0 : i32
    %c0_i32_1 = arith.constant 0 : i32
    return %c0_i32, %arg0, %c0_i32_0 : i32, i32, i32
  }
  func.func @transform_1(%arg0: i32) -> (i32, i32, i32) {
    %c0_i32 = arith.constant 0 : i32
    %c0_i32_0 = arith.constant 0 : i32
    %c0_i32_1 = arith.constant 0 : i32
    return %c0_i32, %arg0, %c0_i32_0 : i32, i32, i32
  }
  func.func @transform_2(%arg0: i32) -> (i32, i32, i32) {
    %c0_i32 = arith.constant 0 : i32
    %c0_i32_0 = arith.constant 0 : i32
    %c0_i32_1 = arith.constant 0 : i32
    return %c0_i32, %arg0, %c0_i32_0 : i32, i32, i32
  }
  func.func @transform_3(%arg0: i32) -> (i32, i32, i32) {
    %c0_i32 = arith.constant 0 : i32
    %c0_i32_0 = arith.constant 0 : i32
    %c0_i32_1 = arith.constant 0 : i32
    return %c0_i32, %arg0, %c0_i32_0 : i32, i32, i32
  }
  func.func @transform_4(%arg0: i32) -> (i32, i32, i32) {
    %c0_i32 = arith.constant 0 : i32
    %c0_i32_0 = arith.constant 0 : i32
    %c0_i32_1 = arith.constant 0 : i32
    return %c0_i32, %arg0, %c0_i32_0 : i32, i32, i32
  }
  func.func @transform_5(%arg0: i32) -> (i32, i32, i32) {
    %c0_i32 = arith.constant 0 : i32
    %c0_i32_0 = arith.constant 0 : i32
    %c0_i32_1 = arith.constant 0 : i32
    return %c0_i32, %arg0, %c0_i32_0 : i32, i32, i32
  }
  func.func @transform_6(%arg0: i32) -> (i32, i32, i32) {
    %c0_i32 = arith.constant 0 : i32
    %c0_i32_0 = arith.constant 0 : i32
    %c0_i32_1 = arith.constant 0 : i32
    return %c0_i32, %arg0, %c0_i32_0 : i32, i32, i32
  }
  func.func @transform_7(%arg0: i32) -> (i32, i32, i32) {
    %c0_i32 = arith.constant 0 : i32
    %c0_i32_0 = arith.constant 0 : i32
    %c0_i32_1 = arith.constant 0 : i32
    return %c0_i32, %arg0, %c0_i32_0 : i32, i32, i32
  }
  func.func @transform_8(%arg0: i32) -> (i32, i32, i32) {
    %c0_i32 = arith.constant 0 : i32
    %c0_i32_0 = arith.constant 0 : i32
    %c0_i32_1 = arith.constant 0 : i32
    return %c0_i32, %arg0, %c0_i32_0 : i32, i32, i32
  }
}

</mosaic_0001>

<llo_original>
// kernel: tpu_custom_call.1
$region0: #{tpu_custom_call.1}
  #allocation0 [shape = 'u32[]', space=smem, size = 0x4, offset = 0x4, fixed_abs, tag = 'smem constant byte address 0x4 - core index']
  #allocation1 [shape = 'u32[72,128]{1,0:T(1,128)}', space=vmem, size = 0x9000, scoped, tag = 'internal scratch']
  %s0 = inlined_call_operand.vmem [shape: f32[2,8,32], index: 0, kind: input, shape index: {}]
  %s1 = inlined_call_operand.vmem [shape: f32[2,8,1], index: 1, kind: input, shape index: {}]
  %s2 = inlined_call_operand.vmem [shape: f32[1,8,1], index: 2, kind: input, shape index: {}]
  %s3 = inlined_call_operand.vmem [shape: f32[1,8,1], index: 3, kind: input, shape index: {}]
  %s4 = inlined_call_operand.vmem [shape: f32[1,8,1], index: 4, kind: input, shape index: {}]
  %s5 = inlined_call_operand.vmem [shape: f32[1,8,1], index: 5, kind: input, shape index: {}]
  %s6 = inlined_call_operand.hbm [shape: f32[2,8,32], index: 6, kind: output, shape index: {0}]
  %s7 = inlined_call_operand.vmem [shape: f32[1,8,1], index: 7, kind: output, shape index: {1}]
  %s8 = inlined_call_operand.vmem [shape: f32[1,8,1], index: 8, kind: output, shape index: {2}]
  %9 = xla_tuple %s6, %s7, %s8
  %s10 = sld [smem:[#allocation0]]
  $region50: #{tpu_custom_call.1} parent=0
    _
  %s12 = ssub.s32 1, %s10
  %s13 = scalar_select 0, %s12, %s10
  $region1: #{tpu_custom_call.1} parent=0
    #allocation2 [shape = 'u8[8192]{0}', space=vmem, size = 0x2000, scoped, tag = 'output window, operand 0, single buffered']
    #allocation3 [shape = 's32[1]{0}', space=sflag, size = 0x4, scoped, tag = 'scoped memory for tpu_custom_call.1']
    %14 = vsyncpa [#allocation3], 0
    // Predicated region
    $region2: #{tpu_custom_call.1} parent=1 // pred_check
      _
    $region3: #{tpu_custom_call.1} parent=1 // pred_check_branch
      %16 = sbr.rel (0) target = $region5
    $region4: #{tpu_custom_call.1} parent=1 // pred_region
      _
    $region5: #{tpu_custom_call.1} parent=1 // pred_fallthru
      _
    // Predicated region
    $region6: #{tpu_custom_call.1} parent=1 // pred_check
      _
    $region7: #{tpu_custom_call.1} parent=1 // pred_check_branch
      %18 = sbr.rel (0) target = $region9
    $region8: #{tpu_custom_call.1} parent=1 // pred_region
      _
    $region9: #{tpu_custom_call.1} parent=1 // pred_fallthru
      _
    // Predicated region
    $region10: #{tpu_custom_call.1} parent=1 // pred_check
      _
    $region11: #{tpu_custom_call.1} parent=1 // pred_check_branch
      %20 = sbr.rel (0) target = $region13
    $region12: #{tpu_custom_call.1} parent=1 // pred_region
      _
    $region13: #{tpu_custom_call.1} parent=1 // pred_fallthru
      _
    // Predicated region
    $region14: #{tpu_custom_call.1} parent=1 // pred_check
      _
    $region15: #{tpu_custom_call.1} parent=1 // pred_check_branch
      %22 = sbr.rel (0) target = $region17
    $region16: #{tpu_custom_call.1} parent=1 // pred_region
      _
    $region17: #{tpu_custom_call.1} parent=1 // pred_fallthru
      _
    // Predicated region
    $region18: #{tpu_custom_call.1} parent=1 // pred_check
      _
    $region19: #{tpu_custom_call.1} parent=1 // pred_check_branch
      %24 = sbr.rel (0) target = $region21
    $region20: #{tpu_custom_call.1} parent=1 // pred_region
      _
    $region21: #{tpu_custom_call.1} parent=1 // pred_fallthru
      _
    // Predicated region
    $region22: #{tpu_custom_call.1} parent=1 // pred_check
      _
    $region23: #{tpu_custom_call.1} parent=1 // pred_check_branch
      %26 = sbr.rel (0) target = $region25
    $region24: #{tpu_custom_call.1} parent=1 // pred_region
      _
    $region25: #{tpu_custom_call.1} parent=1 // pred_fallthru
      _
    %v27 = vld [vmem:[%s1] sm:$0xff]
    %v28 = vld [vmem:[%s1 + $0x8] sm:$0xff]
    %v29 = vld [vmem:[%s0] sm:$0xff]
    %v30 = vld [vmem:[%s0 + $0x8] sm:$0xff]
    %32 = vset.pattern.permute.xlu0 0
    %33 = vperm.xlu0 %32, %v27
    %v34 = vpop.permute.xlu0 %33
    %37 = vset.pattern.permute.xlu0 0
    %38 = vperm.xlu0 %37, %v28
    %v39 = vpop.permute.xlu0 %38
    %v41 = vmul.f32 %v29, %v34
    %v42 = vmul.f32 %v30, %v39
    %vm43 = vcmask 261120
    %v44 = vsel %vm43, %v41, 0.0
    %v45 = vsel %vm43, %v42, 0.0
    %v46 = vadd.f32 %v44, %v45
    %v47 = vmul.f32 %v41, %v29
    %v48 = vmul.f32 %v42, %v30
    %v49 = vsel %vm43, %v47, 0.0
    %v50 = vsel %vm43, %v48, 0.0
    %v51 = vadd.f32 %v49, %v50
    %v52 = vsel %vm43, %v46, 0.0
    %53 = vadd.xlane.f32.xlu0 %v52
    %v54 = vpop.xlane.xlu0 %53
    %v55 = vsel %vm43, %v51, 0.0
    %56 = vadd.xlane.f32.xlu0 %v55
    %v57 = vpop.xlane.xlu0 %56
    %vm58 = vcmask 7168
    %v59 = vsel %vm58, %v27, 0.0
    %v60 = vsel %vm58, %v28, 0.0
    %v61 = vadd.f32 %v59, %v60
    %v62 = vmul.f32 %v61, 32.0
    %v63 = vrcp.pop %v62
    %v64 = vmul.f32 %v62, %v63
    %v65 = vsub.f32 1.0, %v64
    %v66 = vmul.f32 %v63, %v65
    %v67 = vadd.f32 %v63, %v66
    %vm68 = vweird.f32 %v62
    %vm69 = vweird.f32 %v63
    %vm70 = vmor %vm68, %vm69
    %v71 = vsel %vm70, %v63, %v67
    %v72 = vand.u32 2147483647, %v62
    %vm73 = vcmp.eq.f32.partialorder %v72, 8.507059e+37
    %v74 = vand.u32 %v62, 2147483648
    %v75 = vor.u32 1.1754944e-38, %v74
    %v76 = vsel %vm73, %v75, %v71
    %v77 = vmul.f32 1.0, %v76
    %v78 = vmul.f32 %v54, %v77
    %v79 = vmul.f32 %v57, %v77
    %v80 = vmul.f32 %v78, %v78
    %v81 = vsub.f32 %v79, %v80
    %v82 = vmax.f32 %v81, 1e-05
    %v83 = vmin.f32 %v82, 1e+10
    %v84 = vrsqrt.pop %v83
    %v85 = vmul.f32 %v84, %v83
    %v86 = vmul.f32 %v85, %v84
    %v87 = vmul.f32 0.5, %v86
    %v88 = vsub.f32 1.5, %v87
    %v89 = vmul.f32 %v84, %v88
    %v90 = vmul.f32 %v83, %v89
    %vm91 = vcmp.eq.f32.partialorder %v83, inf
    %v92 = vsel %vm91, %v83, %v90
    %vm93 = vcmp.eq.f32.partialorder %v83, 0.0
    %v94 = vand.u32 %v83, 2147483648
    %v95 = vsel %vm93, %v94, %v92
    %v96 = vld [vmem:[%s4] sm:$0xff]
    %v97 = vld [vmem:[%s5] sm:$0xff]
    %v98 = vrcp.pop %v97
    %v99 = vmul.f32 %v97, %v98
    %v100 = vsub.f32 1.0, %v99
    %v101 = vmul.f32 %v98, %v100
    %v102 = vadd.f32 %v98, %v101
    %vm103 = vweird.f32 %v97
    %vm104 = vweird.f32 %v98
    %vm105 = vmor %vm103, %vm104
    %v106 = vsel %vm105, %v98, %v102
    %v107 = vand.u32 2147483647, %v97
    %vm108 = vcmp.eq.f32.partialorder %v107, 8.507059e+37
    %v109 = vand.u32 %v97, 2147483648
    %v110 = vor.u32 1.1754944e-38, %v109
    %v111 = vsel %vm108, %v110, %v106
    %v112 = vmul.f32 %v95, %v111
    %v113 = vmax.f32 %v112, 1.0
    %v114 = vmin.f32 %v113, 1.0
    %v115 = vsub.f32 %v78, %v96
    %v116 = vmul.f32 %v115, %v111
    %v117 = vmax.f32 %v116, -0.0
    %v118 = vmin.f32 %v117, 0.0
    %v119 = vld [vmem:[%s2] sm:$0xff]
    %v120 = vld [vmem:[%s3] sm:$0xff]
    %v121 = vmul.f32 %v114, %v119
    %v122 = vrcp.pop %v95
    %v123 = vmul.f32 %v95, %v122
    %v124 = vsub.f32 1.0, %v123
    %v125 = vmul.f32 %v122, %v124
    %v126 = vadd.f32 %v122, %v125
    %vm127 = vweird.f32 %v95
    %vm128 = vweird.f32 %v122
    %vm129 = vmor %vm127, %vm128
    %v130 = vsel %vm129, %v122, %v126
    %v131 = vand.u32 2147483647, %v95
    %vm132 = vcmp.eq.f32.partialorder %v131, 8.507059e+37
    %v133 = vand.u32 %v95, 2147483648
    %v134 = vor.u32 1.1754944e-38, %v133
    %v135 = vsel %vm132, %v134, %v130
    %v136 = vmul.f32 %v121, %v135
    %v137 = vmul.f32 %v119, %v118
    %v138 = vmul.f32 %v78, %v136
    %v139 = vsub.f32 %v137, %v138
    %v140 = vadd.f32 %v139, %v120
    %142 = vset.pattern.permute.xlu0 0
    %143 = vperm.xlu0 %142, %v136
    %v144 = vpop.permute.xlu0 %143
    %v146 = vmul.f32 %v29, %v144
    %v147 = vmul.f32 %v30, %v144
    %149 = vset.pattern.permute.xlu0 0
    %150 = vperm.xlu0 %149, %v140
    %v151 = vpop.permute.xlu0 %150
    %v153 = vadd.f32 %v146, %v151
    %v154 = vadd.f32 %v147, %v151
    %155 = vst.msk [vmem:[#allocation2] sm:$0xff] %vm43, %v153
    %156 = vst.msk [vmem:[#allocation2 + $0x8] sm:$0xff] %vm43, %v154
    %v157 = vmul.f32 %v96, 0.9
    %v158 = vmul.f32 %v78, 0.1
    %v159 = vadd.f32 %v157, %v158
    %160 = vst.msk [vmem:[%s7] sm:$0xff] %vm58, %v159
    %v161 = vmul.f32 %v97, 0.9
    %v162 = vmul.f32 %v95, 0.1
    %v163 = vadd.f32 %v161, %v162
    %164 = vst.msk [vmem:[%s8] sm:$0xff] %vm58, %v163
    // Predicated region
    $region26: #{tpu_custom_call.1} parent=1 // pred_check
      _
    $region27: #{tpu_custom_call.1} parent=1 // pred_check_branch
      %166 = sbr.rel (0) target = $region29
    $region28: #{tpu_custom_call.1} parent=1 // pred_region
      %168 = vsyncadd [#allocation3], 0
      %s169 = sshll.u32 [#allocation2], 4
      %s170 = int_to_ptr.vmem [resolvable:$true] %s169
      %s171 = sshll.u32 %s6, 4
      %s172 = int_to_ptr.hbm [resolvable:$true] %s171
      %177 = dma.vmem_to_hbm [thread:$0]  %s170, 256, %s172, [#allocation3], 128, 128, 8
    $region29: #{tpu_custom_call.1} parent=1 // pred_fallthru
      _
    // Predicated region
    $region30: #{tpu_custom_call.1} parent=1 // pred_check
      _
    $region31: #{tpu_custom_call.1} parent=1 // pred_check_branch
      %179 = sbr.rel (0) target = $region33
    $region32: #{tpu_custom_call.1} parent=1 // pred_region
      _
    $region33: #{tpu_custom_call.1} parent=1 // pred_fallthru
      _
    // Predicated region
    $region34: #{tpu_custom_call.1} parent=1 // pred_check
      _
    $region35: #{tpu_custom_call.1} parent=1 // pred_check_branch
      %181 = sbr.rel (0) target = $region37
    $region36: #{tpu_custom_call.1} parent=1 // pred_region
      _
    $region37: #{tpu_custom_call.1} parent=1 // pred_fallthru
      _
    // Predicated region
    $region38: #{tpu_custom_call.1} parent=1 // pred_check
      _
    $region39: #{tpu_custom_call.1} parent=1 // pred_check_branch
      %183 = sbr.rel (0) target = $region41
    $region40: #{tpu_custom_call.1} parent=1 // pred_region
      %185 = dma.done [#allocation3], 256
    $region41: #{tpu_custom_call.1} parent=1 // pred_fallthru
      _
    // Predicated region
    $region42: #{tpu_custom_call.1} parent=1 // pred_check
      _
    $region43: #{tpu_custom_call.1} parent=1 // pred_check_branch
      %187 = sbr.rel (0) target = $region45
    $region44: #{tpu_custom_call.1} parent=1 // pred_region
      _
    $region45: #{tpu_custom_call.1} parent=1 // pred_fallthru
      _
    // Predicated region
    $region46: #{tpu_custom_call.1} parent=1 // pred_check
      _
    $region47: #{tpu_custom_call.1} parent=1 // pred_check_branch
      %189 = sbr.rel (0) target = $region49
    $region48: #{tpu_custom_call.1} parent=1 // pred_region
      _
    $region49: #{tpu_custom_call.1} parent=1 // pred_fallthru
      _
    %190 = vsyncpa [#allocation3], 1

</llo_original>
